<compile_context>
chip_gen: v7x
topology: tpu7x:2x2x1
jax: 0.10.0
libtpu: 0.0.40
codegen_flags: <defaults>
</compile_context>

<pallas_src>
import jax
import jax.numpy as jnp
from jax.experimental import pallas as pl
from jax.experimental.pallas import tpu as pltpu


def mlp_kernel(x_ref, p_ref, o_ref):
    # x_ref: (1, B)  input row, batch on the lane axis (padded lanes masked out)
    # p_ref: (H, 4)  packed params: [:,0]=hidden.weight, [:,1]=hidden.bias,
    #                [:,2]=predict.weight (as column), [:,3]=predict.bias / H
    # o_ref: (1, B)  output row, batch on the lane axis
    x = x_ref[...]                                   # (1, B)
    p = p_ref[...]                                   # (H, 4)
    w1 = p[:, 0:1]                                   # (H, 1)
    b1 = p[:, 1:2]                                   # (H, 1)
    w2 = p[:, 2:3]                                   # (H, 1)
    b2h = p[:, 3:4]                                  # (H, 1): b2/H per row

    # Linear1 + ReLU: F == 1 => outer product => pure VPU broadcast multiply-add.
    h = jnp.maximum(w1 * x + b1, 0.0)                # (H, B)

    # Linear2: O == 1 => dot along H => VPU mul + XLU sublane reduce.
    # The b2/H column sums back to +b2 per lane. No cross-lane (axis=-1)
    # reduction anywhere, so padded-lane garbage never contaminates real lanes.
    y = jnp.sum(h * w2 + b2h, axis=0, keepdims=True)  # (1, B)

    o_ref[...] = y.astype(o_ref.dtype)


@jax.jit
def net_forward(x, w1, b1, w2, b2):
    """Forward pass of `Net` using PyTorch parameter layouts.

    x:  (B, 1)   input
    w1: (H, 1)   hidden.weight
    b1: (H,)     hidden.bias
    w2: (1, H)   predict.weight
    b2: (1,)     predict.bias
    returns: (B, 1)
    """
    B, F = x.shape
    assert F == 1, "Net was defined with n_features == 1"
    H = w1.shape[0]

    # (B,1)->(1,B) is a free row-major bitcast; cast guards non-f32 callers.
    x_row = x.astype(jnp.float32).reshape(1, B)

    # Pack all parameters into one VMEM array -> single input DMA.
    # (If weights are reused across many calls, hoist this packing out of the
    #  hot path; here it fuses under jit and is negligible.)
    params = jnp.concatenate(
        [
            w1.reshape(H, 1).astype(jnp.float32),                     # col 0: w1
            b1.reshape(H, 1).astype(jnp.float32),                     # col 1: b1
            w2.reshape(H, 1).astype(jnp.float32),                     # col 2: w2 as column
            jnp.broadcast_to(
                b2.astype(jnp.float32).reshape(1, 1) * (1.0 / H), (H, 1)
            ),                                                        # col 3: b2/H
        ],
        axis=1,
    )                                                                 # (H, 4)

    out_row = pl.pallas_call(
        mlp_kernel,
        out_shape=jax.ShapeDtypeStruct((1, B), jnp.float32),
        # grid=() — single invocation, whole arrays resident in VMEM,
        # no per-step pipeline bookkeeping or double-buffer DMAs.
        in_specs=[
            pl.BlockSpec(memory_space=pltpu.MemorySpace.VMEM),  # x row
            pl.BlockSpec(memory_space=pltpu.MemorySpace.VMEM),  # packed params
        ],
        out_specs=pl.BlockSpec(memory_space=pltpu.MemorySpace.VMEM),
        cost_estimate=pl.CostEstimate(
            flops=5 * B * H,            # ~2BH (L1) + BH (relu) + 2BH (L2)
            transcendentals=0,
            bytes_accessed=(2 * B + 4 * H) * 4,
        ),
    )(x_row, params)

    # (1,B)->(B,1) is again a free bitcast.
    return out_row.reshape(B, 1)


if __name__ == "__main__":
    # Mirrors the reference script: x = unsqueeze(linspace(-1, 1, 100), dim=1)
    n_features, n_hiddens, n_outputs = 1, 32, 1
    batch = 100

    x = jnp.expand_dims(jnp.linspace(-1.0, 1.0, batch, dtype=jnp.float32), axis=1)

    # Deterministic parameter init in PyTorch nn.Linear layouts.
    key = jax.random.PRNGKey(0)
    k1, k2, k3, k4 = jax.random.split(key, 4)
    w1 = jax.random.normal(k1, (n_hiddens, n_features), jnp.float32) * 0.5  # hidden.weight
    b1 = jax.random.normal(k2, (n_hiddens,), jnp.float32) * 0.1             # hidden.bias
    w2 = jax.random.normal(k3, (n_outputs, n_hiddens), jnp.float32) * 0.5   # predict.weight
    b2 = jax.random.normal(k4, (n_outputs,), jnp.float32) * 0.1             # predict.bias

    out = jax.block_until_ready(net_forward(x, w1, b1, w2, b2))

    # Pure-JAX reference of the same forward pass (PyTorch semantics: x @ W^T + b).
    ref = jnp.maximum(x @ w1.T + b1, 0.0) @ w2.T + b2
    assert out.shape == (batch, n_outputs)
    assert jnp.allclose(out, ref, atol=1e-5, rtol=1e-5)

    print("KERNEL_OK")
</pallas_src>

<mosaic_0001>
module attributes {stable_mosaic.version = 11 : i64} {
  func.func @mlp_kernel(%arg0: memref<1x100xf32, #tpu.memory_space<vmem>>, %arg1: memref<32x4xf32, #tpu.memory_space<vmem>>, %arg2: memref<1x100xf32, #tpu.memory_space<vmem>>) attributes {dimension_semantics = [], scalar_prefetch = 0 : i64, scratch_operands = 0 : i64, tpu.core_type = #tpu.core_type<tc>} {
    %c0 = arith.constant 0 : index
    %c0_0 = arith.constant 0 : index
    %0 = vector.load %arg0[%c0, %c0_0] : memref<1x100xf32, #tpu.memory_space<vmem>>, vector<1x100xf32>
    %c0_1 = arith.constant 0 : index
    %c0_2 = arith.constant 0 : index
    %1 = vector.load %arg1[%c0_1, %c0_2] : memref<32x4xf32, #tpu.memory_space<vmem>>, vector<32x4xf32>
    %2 = vector.extract_strided_slice %1 {offsets = [0, 0], sizes = [32, 1], strides = [1, 1]} : vector<32x4xf32> to vector<32x1xf32>
    %3 = vector.extract_strided_slice %1 {offsets = [0, 1], sizes = [32, 1], strides = [1, 1]} : vector<32x4xf32> to vector<32x1xf32>
    %4 = vector.extract_strided_slice %1 {offsets = [0, 2], sizes = [32, 1], strides = [1, 1]} : vector<32x4xf32> to vector<32x1xf32>
    %5 = vector.extract_strided_slice %1 {offsets = [0, 3], sizes = [32, 1], strides = [1, 1]} : vector<32x4xf32> to vector<32x1xf32>
    %6 = vector.broadcast %2 : vector<32x1xf32> to vector<32x100xf32>
    %7 = vector.broadcast %0 : vector<1x100xf32> to vector<32x100xf32>
    %8 = arith.mulf %6, %7 : vector<32x100xf32>
    %9 = vector.broadcast %3 : vector<32x1xf32> to vector<32x100xf32>
    %10 = arith.addf %8, %9 : vector<32x100xf32>
    %cst = arith.constant 0.000000e+00 : f32
    %11 = vector.broadcast %cst : f32 to vector<32x100xf32>
    %12 = arith.maximumf %10, %11 : vector<32x100xf32>
    %13 = vector.broadcast %4 : vector<32x1xf32> to vector<32x100xf32>
    %14 = arith.mulf %12, %13 : vector<32x100xf32>
    %15 = vector.broadcast %5 : vector<32x1xf32> to vector<32x100xf32>
    %16 = arith.addf %14, %15 : vector<32x100xf32>
    %cst_3 = arith.constant dense<0.000000e+00> : vector<100xf32>
    %17 = vector.multi_reduction <add>, %16, %cst_3 [0] : vector<32x100xf32> to vector<100xf32>
    %18 = vector.shape_cast %17 : vector<100xf32> to vector<1x100xf32>
    %c0_4 = arith.constant 0 : index
    %c0_5 = arith.constant 0 : index
    %19 = vector.load %arg2[%c0_4, %c0_5] : memref<1x100xf32, #tpu.memory_space<vmem>>, vector<1x100xf32>
    tpu.vector_store %arg2[%c0_4, %c0_5], %18 {strides = array<i32>} : memref<1x100xf32, #tpu.memory_space<vmem>>, vector<1x100xf32>,
    return
  }
}

</mosaic_0001>

<llo_original>
// kernel: net_forward.1
$region0: #{net_forward.1}
  #allocation0 [shape = 'u32[]', space=smem, size = 0x4, offset = 0x4, fixed_abs, tag = 'smem constant byte address 0x4 - core index']
  #allocation1 [shape = 'u32[144,128]{1,0:T(1,128)}', space=vmem, size = 0x12000, scoped, tag = 'internal scratch']
  %s0 = inlined_call_operand.vmem [shape: f32[1,100], index: 0, kind: input, shape index: {}]
  %s1 = inlined_call_operand.vmem [shape: f32[32,4], index: 1, kind: input, shape index: {}]
  %s2 = inlined_call_operand.hbm [shape: f32[1,100], index: 2, kind: output, shape index: {}]
  %s3 = sld [smem:[#allocation0]]
  $region18: #{net_forward.1} parent=0
    _
  %s5 = ssub.s32 1, %s3
  %s6 = scalar_select 0, %s5, %s3
  $region1: #{net_forward.1} parent=0
    #allocation2 [shape = 'u8[512]{0}', space=vmem, size = 0x400, scoped, tag = 'output window, operand 0, single buffered']
    #allocation3 [shape = 's32[1]{0}', space=sflag, size = 0x4, scoped, tag = 'scoped memory for net_forward.1']
    %7 = vsyncpa [#allocation3], 0
    // Predicated region
    $region2: #{net_forward.1} parent=1 // pred_check
      _
    $region3: #{net_forward.1} parent=1 // pred_check_branch
      %9 = sbr.rel (0) target = $region5
    $region4: #{net_forward.1} parent=1 // pred_region
      _
    $region5: #{net_forward.1} parent=1 // pred_fallthru
      _
    // Predicated region
    $region6: #{net_forward.1} parent=1 // pred_check
      _
    $region7: #{net_forward.1} parent=1 // pred_check_branch
      %11 = sbr.rel (0) target = $region9
    $region8: #{net_forward.1} parent=1 // pred_region
      _
    $region9: #{net_forward.1} parent=1 // pred_fallthru
      _
    %v12 = vld [vmem:[%s0] sm:$0x1]
    %v13 = vld [vmem:[%s1] sm:$0xff]
    %v14 = vld [vmem:[%s1 + $0x8] sm:$0xff]
    %v15 = vld [vmem:[%s1 + $0x10] sm:$0xff]
    %v16 = vld [vmem:[%s1 + $0x18] sm:$0xff]
    %18 = vset.pattern.permute.xlu0 0
    %19 = vperm.xlu0 %18, %v13
    %v20 = vpop.permute.xlu0 %19
    %23 = vset.pattern.permute.xlu0 0
    %24 = vperm.xlu0 %23, %v14
    %v25 = vpop.permute.xlu0 %24
    %28 = vset.pattern.permute.xlu0 0
    %29 = vperm.xlu0 %28, %v15
    %v30 = vpop.permute.xlu0 %29
    %33 = vset.pattern.permute.xlu0 0
    %34 = vperm.xlu0 %33, %v16
    %v35 = vpop.permute.xlu0 %34
    %v38 = vlaneseq
    %v39 = vshrl.u32 %v38, 7
    %v40 = vsub.s32 0, %v39
    %v41 = vrot.slane %v12, %v40
    %v43 = vmul.f32 %v20, %v41
    %v44 = vmul.f32 %v25, %v41
    %v45 = vmul.f32 %v30, %v41
    %v46 = vmul.f32 %v35, %v41
    %47 = vset.pattern.permute.xlu0 1
    %48 = vperm.xlu0 %47, %v13
    %v49 = vpop.permute.xlu0 %48
    %51 = vset.pattern.permute.xlu0 1
    %52 = vperm.xlu0 %51, %v14
    %v53 = vpop.permute.xlu0 %52
    %55 = vset.pattern.permute.xlu0 1
    %56 = vperm.xlu0 %55, %v15
    %v57 = vpop.permute.xlu0 %56
    %59 = vset.pattern.permute.xlu0 1
    %60 = vperm.xlu0 %59, %v16
    %v61 = vpop.permute.xlu0 %60
    %v63 = vadd.f32 %v43, %v49
    %v64 = vadd.f32 %v44, %v53
    %v65 = vadd.f32 %v45, %v57
    %v66 = vadd.f32 %v46, %v61
    %v67 = vmax.f32 %v63, 0.0
    %v68 = vmax.f32 %v64, 0.0
    %v69 = vmax.f32 %v65, 0.0
    %v70 = vmax.f32 %v66, 0.0
    %71 = vset.pattern.permute.xlu0 2
    %72 = vperm.xlu0 %71, %v13
    %v73 = vpop.permute.xlu0 %72
    %75 = vset.pattern.permute.xlu0 2
    %76 = vperm.xlu0 %75, %v14
    %v77 = vpop.permute.xlu0 %76
    %79 = vset.pattern.permute.xlu0 2
    %80 = vperm.xlu0 %79, %v15
    %v81 = vpop.permute.xlu0 %80
    %83 = vset.pattern.permute.xlu0 2
    %84 = vperm.xlu0 %83, %v16
    %v85 = vpop.permute.xlu0 %84
    %v87 = vmul.f32 %v67, %v73
    %v88 = vmul.f32 %v68, %v77
    %v89 = vmul.f32 %v69, %v81
    %v90 = vmul.f32 %v70, %v85
    %91 = vset.pattern.permute.xlu0 3
    %92 = vperm.xlu0 %91, %v13
    %v93 = vpop.permute.xlu0 %92
    %95 = vset.pattern.permute.xlu0 3
    %96 = vperm.xlu0 %95, %v14
    %v97 = vpop.permute.xlu0 %96
    %99 = vset.pattern.permute.xlu0 3
    %100 = vperm.xlu0 %99, %v15
    %v101 = vpop.permute.xlu0 %100
    %103 = vset.pattern.permute.xlu0 3
    %104 = vperm.xlu0 %103, %v16
    %v105 = vpop.permute.xlu0 %104
    %v107 = vadd.f32 %v87, %v93
    %v108 = vadd.f32 %v88, %v97
    %v109 = vadd.f32 %v89, %v101
    %v110 = vadd.f32 %v90, %v105
    %vm111 = vcmask 818176
    %v112 = vsel %vm111, %v107, 0.0
    %v113 = vsel %vm111, %v108, 0.0
    %v114 = vadd.f32 %v112, %v113
    %v115 = vsel %vm111, %v109, 0.0
    %v116 = vadd.f32 %v114, %v115
    %v117 = vsel %vm111, %v110, 0.0
    %v118 = vadd.f32 %v116, %v117
    %v119 = vrot.slane %v118, 4
    %v120 = vadd.f32 %v118, %v119
    %v121 = vrot.slane %v120, 2
    %v122 = vadd.f32 %v120, %v121
    %v123 = vrot.slane %v122, 1
    %v124 = vadd.f32 %v122, %v123
    %vm125 = vcmask 811008
    %126 = vst.msk [vmem:[#allocation2] sm:$0x1] %vm125, %v124
    // Predicated region
    $region10: #{net_forward.1} parent=1 // pred_check
      _
    $region11: #{net_forward.1} parent=1 // pred_check_branch
      %128 = sbr.rel (0) target = $region13
    $region12: #{net_forward.1} parent=1 // pred_region
      %s130 = ssub.s32 16, 16
      %131 = vsyncadd [#allocation3], %s130
      %s133 = sshll.u32 [#allocation2], 4
      %s134 = int_to_ptr.vmem [resolvable:$true] %s133
      %136 = dma.vmem_to_hbm [thread:$0]  %s134, 16, %s2, [#allocation3]
    $region13: #{net_forward.1} parent=1 // pred_fallthru
      _
    // Predicated region
    $region14: #{net_forward.1} parent=1 // pred_check
      _
    $region15: #{net_forward.1} parent=1 // pred_check_branch
      %138 = sbr.rel (0) target = $region17
    $region16: #{net_forward.1} parent=1 // pred_region
      %139 = dma.done [#allocation3], 16
    $region17: #{net_forward.1} parent=1 // pred_fallthru
      _
    %140 = vsyncpa [#allocation3], 1

</llo_original>
